<compile_context>
chip_gen: v7x
topology: tpu7x:2x2x1
jax: 0.10.0
libtpu: 0.0.40
codegen_flags: <defaults>
</compile_context>

<pallas_src>
import functools

import jax
import jax.numpy as jnp
from jax.experimental import pallas as pl
from jax.experimental.pallas import tpu as pltpu

OBS_SIZE = 6
ACTION_SIZE = 2
HIDDEN_SIZE = ACTION_SIZE * 10   # 20
HIDDEN_PAD = 24                  # next multiple of the 8-sublane f32 alignment (was 32)


def _round_up(x, m):
    return ((x + m - 1) // m) * m


def _cdiv(a, b):
    return -(-a // b)


def ppo_kernel(obs_t_ref, w1t_ref, b1t_ref, w2d_ref, b2d_ref, p0_ref):
    """One batch tile, batch on the lane axis.

    obs_t_ref: (OBS_SIZE, TB)         observations, features x batch
    w1t_ref  : (HIDDEN_PAD, OBS_SIZE) zero-padded w1^T
    b1t_ref  : (HIDDEN_PAD, 1)        zero-padded b1 (column)
    w2d_ref  : (1, HIDDEN_PAD)        zero-padded (w2[:,0]-w2[:,1])^T
    b2d_ref  : (1, 1)                 b2[0]-b2[1]
    p0_ref   : (1, TB)                p(action 0); p(action 1) = 1 - p0 built outside
    """
    # fc1 in transposed layout: (HIDDEN_PAD, OBS) @ (OBS, TB) -> (HIDDEN_PAD, TB)
    h = jnp.dot(w1t_ref[...], obs_t_ref[...], preferred_element_type=jnp.float32)
    h = jnp.tanh(h + b1t_ref[...])            # padded rows -> tanh(0) = 0

    # fc2 folded to the logit difference: (1, HIDDEN_PAD) @ (HIDDEN_PAD, TB) -> (1, TB)
    d = jnp.dot(w2d_ref[...], h, preferred_element_type=jnp.float32) + b2d_ref[...]

    # 2-class softmax == sigmoid(d): exp on the EUP, exact reciprocal (keeps 1e-5 parity).
    p0_ref[...] = pl.reciprocal(1.0 + jnp.exp(-d)).astype(p0_ref.dtype)


def pack_params(w1, b1, w2, b2):
    """Hoisted out of the hot path: call once per policy update, reuse across forwards.

    Weights stored (in_features, out_features): w1 (OBS, HID), b1 (1, HID),
    w2 (HID, ACT), b2 (1, ACT).  Zero padding is numerically inert.
    """
    w1t = jnp.zeros((HIDDEN_PAD, OBS_SIZE), jnp.float32).at[:HIDDEN_SIZE, :].set(
        w1.T.astype(jnp.float32))
    b1t = jnp.zeros((HIDDEN_PAD, 1), jnp.float32).at[:HIDDEN_SIZE, 0].set(
        b1.reshape(-1).astype(jnp.float32))
    w2d = jnp.zeros((1, HIDDEN_PAD), jnp.float32).at[0, :HIDDEN_SIZE].set(
        (w2[:, 0] - w2[:, 1]).astype(jnp.float32))
    b2d = (b2[:, 0] - b2[:, 1]).reshape(1, 1).astype(jnp.float32)
    return w1t, b1t, w2d, b2d


def ppo_forward_tm(obs_t, packed, *, tb=65536, min_grid_steps=1):
    """Fast path: obs already feature-major, shape (OBS_SIZE, B).  Returns (B, ACTION_SIZE).

    tb:             batch-lane tile target (multiple of 128).  64K lanes amortizes the
                    ~0.35us/step grid overhead; worst-case VMEM (~28 MiB) fits the raised limit.
    min_grid_steps: set to 2 on v7x so the "parallel" batch axis shards across both TCs.
    """
    B = obs_t.shape[1]
    B128 = _round_up(B, 128)
    n_tiles = max(_cdiv(B128, tb), min(min_grid_steps, B128 // 128))
    TB = _round_up(_cdiv(B128, n_tiles), 128)
    B_pad = TB * n_tiles

    obs_t = obs_t.astype(jnp.float32)
    if B_pad != B:                                   # pad only the batch tail
        obs_t = jnp.pad(obs_t, ((0, 0), (0, B_pad - B)))

    w1t, b1t, w2d, b2d = packed
    p0 = pl.pallas_call(
        ppo_kernel,
        out_shape=jax.ShapeDtypeStruct((1, B_pad), jnp.float32),
        grid=(n_tiles,),
        in_specs=[
            pl.BlockSpec((OBS_SIZE, TB), lambda i: (0, i)),           # pipelined obs tiles
            pl.BlockSpec((HIDDEN_PAD, OBS_SIZE), lambda i: (0, 0)),   # params stay resident
            pl.BlockSpec((HIDDEN_PAD, 1), lambda i: (0, 0)),
            pl.BlockSpec((1, HIDDEN_PAD), lambda i: (0, 0)),
            pl.BlockSpec((1, 1), lambda i: (0, 0)),
        ],
        out_specs=pl.BlockSpec((1, TB), lambda i: (0, i)),            # lane-dense p0 slab
        compiler_params=pltpu.CompilerParams(
            dimension_semantics=("parallel",),       # no-op on 1-TC v5e/v6e, shards on v7x
            vmem_limit_bytes=48 * 1024 * 1024,       # headroom for 64K-lane tiles, < v7x 64 MiB
        ),
    )(obs_t, w1t, b1t, w2d, b2d)

    p0 = p0[0, :B]
    return jnp.stack([p0, 1.0 - p0], axis=1)


def _xla_forward_packed(obs, packed):
    """Plain-XLA fallback for tiny batches (kernel launch would dominate)."""
    w1t, b1t, w2d, b2d = packed
    h = jnp.tanh(obs.astype(jnp.float32) @ w1t.T + b1t[:, 0])
    d = h @ w2d[0] + b2d[0, 0]
    p0 = jax.nn.sigmoid(d)
    return jnp.stack([p0, 1.0 - p0], axis=1)


def ppo_forward(obs, packed, *, tb=65536, min_grid_steps=1, small_batch_fallback=None):
    """obs: (B, OBS_SIZE). Returns (B, ACTION_SIZE) softmax probabilities.

    Keep this call inside the caller's jit so the obs.T fuses into whatever produced obs
    (removes a standalone HBM transpose pass).  For rollout loops with tiny B, pass e.g.
    small_batch_fallback=4096 to skip the pallas_call launch entirely.
    """
    B = obs.shape[0]
    if small_batch_fallback is not None and B < small_batch_fallback:
        return _xla_forward_packed(obs, packed)
    return ppo_forward_tm(obs.T, packed, tb=tb, min_grid_steps=min_grid_steps)


def init_params(key):
    # PyTorch nn.Linear default init: U(-1/sqrt(fan_in), 1/sqrt(fan_in)).
    k1, k2, k3, k4 = jax.random.split(key, 4)
    bound1 = 1.0 / jnp.sqrt(jnp.float32(OBS_SIZE))
    bound2 = 1.0 / jnp.sqrt(jnp.float32(HIDDEN_SIZE))
    w1 = jax.random.uniform(k1, (OBS_SIZE, HIDDEN_SIZE), jnp.float32, -bound1, bound1)
    b1 = jax.random.uniform(k2, (1, HIDDEN_SIZE), jnp.float32, -bound1, bound1)
    w2 = jax.random.uniform(k3, (HIDDEN_SIZE, ACTION_SIZE), jnp.float32, -bound2, bound2)
    b2 = jax.random.uniform(k4, (1, ACTION_SIZE), jnp.float32, -bound2, bound2)
    return w1, b1, w2, b2


def reference_forward(obs, w1, b1, w2, b2):
    h = jnp.tanh(obs @ w1 + b1)
    return jax.nn.softmax(h @ w2 + b2, axis=1)


if __name__ == "__main__":
    key = jax.random.PRNGKey(0)
    pkey, xkey = jax.random.split(key)
    w1, b1, w2, b2 = init_params(pkey)

    packed = pack_params(w1, b1, w2, b2)   # once per policy update, not per forward

    batch = 200                            # small, not a multiple of 128: exercises tail pad
    obs = jax.random.normal(xkey, (batch, OBS_SIZE), jnp.float32)

    fwd = jax.jit(functools.partial(ppo_forward, packed=packed))
    out = jax.block_until_ready(fwd(obs))

    ref = reference_forward(obs, w1, b1, w2, b2)
    assert out.shape == (batch, ACTION_SIZE)
    max_err = float(jnp.max(jnp.abs(out - ref)))
    assert jnp.allclose(out, ref, atol=1e-5, rtol=1e-5), max_err
    assert jnp.allclose(jnp.sum(out, axis=1), jnp.ones((batch,)), atol=1e-5)

    print("KERNEL_OK")
</pallas_src>

<mosaic_0001>
module attributes {stable_mosaic.version = 11 : i64} {
  func.func @ppo_kernel(%arg0: i32, %arg1: memref<6x256xf32, #tpu.memory_space<vmem>>, %arg2: memref<24x6xf32, #tpu.memory_space<vmem>>, %arg3: memref<24x1xf32, #tpu.memory_space<vmem>>, %arg4: memref<1x24xf32, #tpu.memory_space<vmem>>, %arg5: memref<1x1xf32, #tpu.memory_space<vmem>>, %arg6: memref<1x256xf32, #tpu.memory_space<vmem>>) attributes {dimension_semantics = [#tpu.dimension_semantics<parallel>], iteration_bounds = array<i64: 1>, scalar_prefetch = 0 : i64, scratch_operands = 0 : i64, tpu.core_type = #tpu.core_type<tc>, window_params = [{transform_indices = @transform_0, window_bounds = array<i64: 6, 256>}, {pipeline_mode = #tpu.pipeline_mode<synchronous>, transform_indices = @transform_1, window_bounds = array<i64: 24, 6>}, {pipeline_mode = #tpu.pipeline_mode<synchronous>, transform_indices = @transform_2, window_bounds = array<i64: 24, 1>}, {pipeline_mode = #tpu.pipeline_mode<synchronous>, transform_indices = @transform_3, window_bounds = array<i64: 1, 24>}, {pipeline_mode = #tpu.pipeline_mode<synchronous>, transform_indices = @transform_4, window_bounds = array<i64: 1, 1>}, {transform_indices = @transform_5, window_bounds = array<i64: 1, 256>}]} {
    %c0 = arith.constant 0 : index
    %c0_0 = arith.constant 0 : index
    %0 = vector.load %arg2[%c0, %c0_0] : memref<24x6xf32, #tpu.memory_space<vmem>>, vector<24x6xf32>
    %c0_1 = arith.constant 0 : index
    %c0_2 = arith.constant 0 : index
    %1 = vector.load %arg1[%c0_1, %c0_2] : memref<6x256xf32, #tpu.memory_space<vmem>>, vector<6x256xf32>
    %cst = arith.constant dense<0.000000e+00> : vector<24x256xf32>
    %2 = tpu.matmul %0, %1, %cst {dimension_numbers = #tpu.dot_dimension_numbers<[1], [0], [0], [1], [0, 0, 1, 1], [], []>} : vector<24x6xf32>, vector<6x256xf32>, vector<24x256xf32> -> vector<24x256xf32>
    %c0_3 = arith.constant 0 : index
    %c0_4 = arith.constant 0 : index
    %3 = vector.load %arg3[%c0_3, %c0_4] : memref<24x1xf32, #tpu.memory_space<vmem>>, vector<24x1xf32>
    %4 = vector.broadcast %3 : vector<24x1xf32> to vector<24x256xf32>
    %5 = arith.addf %2, %4 : vector<24x256xf32>
    %6 = math.tanh %5 : vector<24x256xf32>
    %c0_5 = arith.constant 0 : index
    %c0_6 = arith.constant 0 : index
    %7 = vector.load %arg4[%c0_5, %c0_6] : memref<1x24xf32, #tpu.memory_space<vmem>>, vector<1x24xf32>
    %cst_7 = arith.constant dense<0.000000e+00> : vector<1x256xf32>
    %8 = tpu.matmul %7, %6, %cst_7 {dimension_numbers = #tpu.dot_dimension_numbers<[1], [0], [0], [1], [0, 0, 1, 1], [], []>} : vector<1x24xf32>, vector<24x256xf32>, vector<1x256xf32> -> vector<1x256xf32>
    %c0_8 = arith.constant 0 : index
    %c0_9 = arith.constant 0 : index
    %9 = vector.load %arg5[%c0_8, %c0_9] : memref<1x1xf32, #tpu.memory_space<vmem>>, vector<1x1xf32>
    %10 = vector.broadcast %9 : vector<1x1xf32> to vector<1x256xf32>
    %11 = arith.addf %8, %10 : vector<1x256xf32>
    %cst_10 = arith.constant 0.000000e+00 : f32
    %12 = vector.broadcast %cst_10 : f32 to vector<1x256xf32>
    %13 = arith.subf %12, %11 : vector<1x256xf32>
    %14 = math.exp %13 : vector<1x256xf32>
    %cst_11 = arith.constant 1.000000e+00 : f32
    %15 = vector.broadcast %cst_11 : f32 to vector<1x256xf32>
    %16 = arith.addf %15, %14 : vector<1x256xf32>
    %17 = tpu.reciprocal %16 : vector<1x256xf32> -> vector<1x256xf32>
    %c0_12 = arith.constant 0 : index
    %c0_13 = arith.constant 0 : index
    %18 = vector.load %arg6[%c0_12, %c0_13] : memref<1x256xf32, #tpu.memory_space<vmem>>, vector<1x256xf32>
    tpu.vector_store %arg6[%c0_12, %c0_13], %17 {strides = array<i32>} : memref<1x256xf32, #tpu.memory_space<vmem>>, vector<1x256xf32>,
    return
  }
  func.func @transform_0(%arg0: i32) -> (i32, i32) {
    %c0_i32 = arith.constant 0 : i32
    %c0_i32_0 = arith.constant 0 : i32
    return %c0_i32, %arg0 : i32, i32
  }
  func.func @transform_1(%arg0: i32) -> (i32, i32) {
    %c0_i32 = arith.constant 0 : i32
    %c0_i32_0 = arith.constant 0 : i32
    %c0_i32_1 = arith.constant 0 : i32
    return %c0_i32, %c0_i32_0 : i32, i32
  }
  func.func @transform_2(%arg0: i32) -> (i32, i32) {
    %c0_i32 = arith.constant 0 : i32
    %c0_i32_0 = arith.constant 0 : i32
    %c0_i32_1 = arith.constant 0 : i32
    return %c0_i32, %c0_i32_0 : i32, i32
  }
  func.func @transform_3(%arg0: i32) -> (i32, i32) {
    %c0_i32 = arith.constant 0 : i32
    %c0_i32_0 = arith.constant 0 : i32
    %c0_i32_1 = arith.constant 0 : i32
    return %c0_i32, %c0_i32_0 : i32, i32
  }
  func.func @transform_4(%arg0: i32) -> (i32, i32) {
    %c0_i32 = arith.constant 0 : i32
    %c0_i32_0 = arith.constant 0 : i32
    %c0_i32_1 = arith.constant 0 : i32
    return %c0_i32, %c0_i32_0 : i32, i32
  }
  func.func @transform_5(%arg0: i32) -> (i32, i32) {
    %c0_i32 = arith.constant 0 : i32
    %c0_i32_0 = arith.constant 0 : i32
    return %c0_i32, %arg0 : i32, i32
  }
}

</mosaic_0001>

<llo_original>
// kernel: ppo_forward.1
$region0: #{ppo_forward.1}
  #allocation0 [shape = 'u32[]', space=smem, size = 0x4, offset = 0x4, fixed_abs, tag = 'smem constant byte address 0x4 - core index']
  #allocation1 [shape = 'u32[144,128]{1,0:T(1,128)}', space=vmem, size = 0x12000, scoped, tag = 'internal scratch']
  #allocation2 [shape = 'f32[1,1]{1,0:T(1,128)S(1)}', space=vmem, size = 0x200, scoped, tag = 'scoped memory for ppo_forward.1']
  %s0 = inlined_call_operand.vmem [shape: f32[6,256], index: 0, kind: input, shape index: {}]
  %s1 = inlined_call_operand.hbm [shape: f32[24,6], index: 1, kind: input, shape index: {}]
  %s2 = inlined_call_operand.vmem [shape: f32[24,1], index: 2, kind: input, shape index: {}]
  %s3 = inlined_call_operand.vmem [shape: f32[1,24], index: 3, kind: input, shape index: {}]
  %s4 = inlined_call_operand.<no memory space> [shape: f32[1,1], index: 4, kind: input, shape index: {}]
  %s5 = inlined_call_operand.vmem [shape: f32[1,256], index: 5, kind: output, shape index: {}]
  %s6 = sld [smem:[#allocation0]]
  $region34: #{ppo_forward.1} parent=0
    _
  %s8 = ssub.s32 1, %s6
  %s9 = scalar_select 0, %s8, %s6
  %v10 = vstv %s4
  %11 = vst [vmem:[#allocation2] sm:$0x1] %v10
  $region1: #{ppo_forward.1} parent=0
    #allocation3 [shape = 'u8[12288]{0}', space=vmem, size = 0x3000, scoped, tag = 'input window, operand 1, single buffered']
    #allocation4 [shape = 's32[1]{0}', space=sflag, size = 0x4, scoped, tag = 'scoped memory for ppo_forward.1']
    %12 = vsyncpa [#allocation4], 0
    // Predicated region
    $region2: #{ppo_forward.1} parent=1 // pred_check
      _
    $region3: #{ppo_forward.1} parent=1 // pred_check_branch
      %14 = sbr.rel (0) target = $region5
    $region4: #{ppo_forward.1} parent=1 // pred_region
      _
    $region5: #{ppo_forward.1} parent=1 // pred_fallthru
      _
    // Predicated region
    $region6: #{ppo_forward.1} parent=1 // pred_check
      _
    $region7: #{ppo_forward.1} parent=1 // pred_check_branch
      %16 = sbr.rel (0) target = $region9
    $region8: #{ppo_forward.1} parent=1 // pred_region
      %s18 = ssub.s32 384, 384
      %19 = vsyncadd [#allocation4], %s18
      %s20 = sshll.u32 [#allocation3], 4
      %s21 = int_to_ptr.vmem [resolvable:$true] %s20
      %26 = dma.hbm_to_vmem [thread:$0]  %s1, 384, %s21, [#allocation4], 128, 128, 8
    $region9: #{ppo_forward.1} parent=1 // pred_fallthru
      _
    // Predicated region
    $region10: #{ppo_forward.1} parent=1 // pred_check
      _
    $region11: #{ppo_forward.1} parent=1 // pred_check_branch
      %28 = sbr.rel (0) target = $region13
    $region12: #{ppo_forward.1} parent=1 // pred_region
      _
    $region13: #{ppo_forward.1} parent=1 // pred_fallthru
      _
    // Predicated region
    $region14: #{ppo_forward.1} parent=1 // pred_check
      _
    $region15: #{ppo_forward.1} parent=1 // pred_check_branch
      %30 = sbr.rel (0) target = $region17
    $region16: #{ppo_forward.1} parent=1 // pred_region
      _
    $region17: #{ppo_forward.1} parent=1 // pred_fallthru
      _
    // Predicated region
    $region18: #{ppo_forward.1} parent=1 // pred_check
      _
    $region19: #{ppo_forward.1} parent=1 // pred_check_branch
      %32 = sbr.rel (0) target = $region21
    $region20: #{ppo_forward.1} parent=1 // pred_region
      _
    $region21: #{ppo_forward.1} parent=1 // pred_fallthru
      _
    // Predicated region
    $region22: #{ppo_forward.1} parent=1 // pred_check
      _
    $region23: #{ppo_forward.1} parent=1 // pred_check_branch
      %34 = sbr.rel (0) target = $region25
    $region24: #{ppo_forward.1} parent=1 // pred_region
      %35 = dma.done [#allocation4], 384
    $region25: #{ppo_forward.1} parent=1 // pred_fallthru
      _
    %v36 = vld [vmem:[#allocation3] sm:$0xff]
    %v37 = vld [vmem:[#allocation3 + $0x8] sm:$0xff]
    %v38 = vld [vmem:[#allocation3 + $0x10] sm:$0xff]
    %v39 = vld [vmem:[%s0] sm:$0x3f]
    %v40 = vld [vmem:[%s0 + $0x8] sm:$0x3f]
    %v41 = vld [vmem:[%s2] sm:$0xff]
    %v42 = vld [vmem:[%s2 + $0x8] sm:$0xff]
    %v43 = vld [vmem:[%s2 + $0x10] sm:$0xff]
    %45 = vset.pattern.permute.xlu0 0
    %46 = vperm.xlu0 %45, %v41
    %v47 = vpop.permute.xlu0 %46
    %50 = vset.pattern.permute.xlu0 0
    %51 = vperm.xlu0 %50, %v42
    %v52 = vpop.permute.xlu0 %51
    %55 = vset.pattern.permute.xlu0 0
    %56 = vperm.xlu0 %55, %v43
    %v57 = vpop.permute.xlu0 %56
    %vm59 = vcmask 48128
    %v61 = vsel %vm59, %v36, 0
    %v64 = vsel %vm59, %v37, 0
    %v67 = vsel %vm59, %v38, 0
    %vm69 = vcmask 1045504
    %v71 = vsel %vm69, %v39, 0
    %v74 = vsel %vm69, %v40, 0
    %76 = vmatprep.subr.mxu0 %v74
    %77 = vmatpush1.msra.mxu0 %v71
    %78 = vmatprep.subr.mxu0 0.0
    %79 = vmatpush1.msra.mxu0 0.0
    %80 = vmatprep.subr.mxu0 0.0
    %81 = vmatpush1.msra.mxu0 0.0
    %82 = vmatprep.subr.mxu0 0.0
    %83 = vmatpush1.msra.mxu0 0.0
    %84 = vmatprep.subr.mxu0 0.0
    %85 = vmatpush1.msra.mxu0 0.0
    %86 = vmatprep.subr.mxu0 0.0
    %87 = vmatpush1.msra.mxu0 0.0
    %88 = vmatprep.subr.mxu0 0.0
    %89 = vmatpush1.msra.mxu0 0.0
    %90 = vmatprep.subr.mxu0 0.0
    %91 = vmatpush1.msra.mxu0 0.0
    %92 = vmatprep.subr.mxu0 0.0
    %93 = vmatpush1.msra.mxu0 0.0
    %94 = vmatprep.subr.mxu0 0.0
    %95 = vmatpush1.msra.mxu0 0.0
    %96 = vmatprep.subr.mxu0 0.0
    %97 = vmatpush1.msra.mxu0 0.0
    %98 = vmatprep.subr.mxu0 0.0
    %99 = vmatpush1.msra.mxu0 0.0
    %100 = vmatprep.subr.mxu0 0.0
    %101 = vmatpush1.msra.mxu0 0.0
    %102 = vmatprep.subr.mxu0 0.0
    %103 = vmatpush1.msra.mxu0 0.0
    %104 = vmatprep.subr.mxu0 0.0
    %105 = vmatpush1.msra.mxu0 0.0
    %106 = vmatprep.subr.mxu0 0.0
    %107 = vmatpush1.msra.mxu0 0.0
    %108 = vmatprep.subr.mxu0 0.0
    %109 = vmatpush1.msra.mxu0 0.0
    %110 = vmatprep.subr.mxu0 0.0
    %111 = vmatpush1.msra.mxu0 0.0
    %112 = vmatprep.subr.mxu0 0.0
    %113 = vmatpush1.msra.mxu0 0.0
    %114 = vmatprep.subr.mxu0 0.0
    %115 = vmatpush1.msra.mxu0 0.0
    %116 = vmatprep.subr.mxu0 0.0
    %117 = vmatpush1.msra.mxu0 0.0
    %118 = vmatprep.subr.mxu0 0.0
    %119 = vmatpush1.msra.mxu0 0.0
    %120 = vmatprep.subr.mxu0 0.0
    %121 = vmatpush1.msra.mxu0 0.0
    %122 = vmatprep.subr.mxu0 0.0
    %123 = vmatpush1.msra.mxu0 0.0
    %124 = vmatprep.subr.mxu0 0.0
    %125 = vmatpush1.msra.mxu0 0.0
    %126 = vmatprep.subr.mxu0 0.0
    %127 = vmatpush1.msra.mxu0 0.0
    %128 = vmatprep.subr.mxu0 0.0
    %129 = vmatpush1.msra.mxu0 0.0
    %130 = vmatprep.subr.mxu0 0.0
    %131 = vmatpush1.msra.mxu0 0.0
    %132 = vmatprep.subr.mxu0 0.0
    %133 = vmatpush1.msra.mxu0 0.0
    %134 = vmatprep.subr.mxu0 0.0
    %135 = vmatpush1.msra.mxu0 0.0
    %136 = vmatprep.subr.mxu0 0.0
    %137 = vmatpush1.msra.mxu0 0.0
    %138 = vmatprep.subr.mxu0 0.0
    %139 = vmatpush1.msra.mxu0 0.0
    %140 = vmatprep.mubr.f32.mxu0 0.0
    %141 = vmatmul.mubr.f32.gmra.mrb[0].mxu0 %v61
    %v142 = vpop.f32.mrb[0].mxu0
    %v143 = vadd.f32 %v47, %v142
    %v144 = vpop.f32.mrb[0].mxu0
    %v145 = vadd.f32 %v47, %v144
    %146 = vmatprep.mubr.f32.mxu0 0.0
    %147 = vmatmul.mubr.f32.gmra.mrb[0].mxu0 %v64
    %v148 = vpop.f32.mrb[0].mxu0
    %v149 = vadd.f32 %v52, %v148
    %v150 = vpop.f32.mrb[0].mxu0
    %v151 = vadd.f32 %v52, %v150
    %152 = vmatprep.mubr.f32.mxu0 0.0
    %153 = vmatmul.mubr.f32.gmra.mrb[0].mxu0 %v67
    %v154 = vpop.f32.mrb[0].mxu0
    %v155 = vadd.f32 %v57, %v154
    %v156 = vpop.f32.mrb[0].mxu0
    %v157 = vadd.f32 %v57, %v156
    %158 = vdwg.mxu0
    %v159 = vtanh.pop %v143
    %v160 = vtanh.pop %v145
    %v161 = vtanh.pop %v149
    %v162 = vtanh.pop %v151
    %v163 = vtanh.pop %v155
    %v164 = vtanh.pop %v157
    %v165 = vld [vmem:[%s3] sm:$0x1]
    %v166 = vld [vmem:[#allocation2] sm:$0x1]
    %168 = vset.pattern.permute.xlu0 0
    %169 = vperm.xlu0 %168, %v166
    %v170 = vpop.permute.xlu0 %169
    %v172 = vlaneseq
    %v173 = vshrl.u32 %v172, 7
    %v174 = vsub.s32 0, %v173
    %v175 = vrot.slane %v170, %v174
    %vm176 = vcmask 195584
    %v178 = vsel %vm176, %v165, 0
    %180 = vmatprep.subr.mxu0 %v160
    %181 = vmatpush1.msra.mxu0 %v159
    %182 = vmatprep.subr.mxu0 %v162
    %183 = vmatpush1.msra.mxu0 %v161
    %184 = vmatprep.subr.mxu0 %v164
    %185 = vmatpush1.msra.mxu0 %v163
    %186 = vmatprep.subr.mxu0 0.0
    %187 = vmatpush1.msra.mxu0 0.0
    %188 = vmatprep.subr.mxu0 0.0
    %189 = vmatpush1.msra.mxu0 0.0
    %190 = vmatprep.subr.mxu0 0.0
    %191 = vmatpush1.msra.mxu0 0.0
    %192 = vmatprep.subr.mxu0 0.0
    %193 = vmatpush1.msra.mxu0 0.0
    %194 = vmatprep.subr.mxu0 0.0
    %195 = vmatpush1.msra.mxu0 0.0
    %196 = vmatprep.subr.mxu0 0.0
    %197 = vmatpush1.msra.mxu0 0.0
    %198 = vmatprep.subr.mxu0 0.0
    %199 = vmatpush1.msra.mxu0 0.0
    %200 = vmatprep.subr.mxu0 0.0
    %201 = vmatpush1.msra.mxu0 0.0
    %202 = vmatprep.subr.mxu0 0.0
    %203 = vmatpush1.msra.mxu0 0.0
    %204 = vmatprep.subr.mxu0 0.0
    %205 = vmatpush1.msra.mxu0 0.0
    %206 = vmatprep.subr.mxu0 0.0
    %207 = vmatpush1.msra.mxu0 0.0
    %208 = vmatprep.subr.mxu0 0.0
    %209 = vmatpush1.msra.mxu0 0.0
    %210 = vmatprep.subr.mxu0 0.0
    %211 = vmatpush1.msra.mxu0 0.0
    %212 = vmatprep.subr.mxu0 0.0
    %213 = vmatpush1.msra.mxu0 0.0
    %214 = vmatprep.subr.mxu0 0.0
    %215 = vmatpush1.msra.mxu0 0.0
    %216 = vmatprep.subr.mxu0 0.0
    %217 = vmatpush1.msra.mxu0 0.0
    %218 = vmatprep.subr.mxu0 0.0
    %219 = vmatpush1.msra.mxu0 0.0
    %220 = vmatprep.subr.mxu0 0.0
    %221 = vmatpush1.msra.mxu0 0.0
    %222 = vmatprep.subr.mxu0 0.0
    %223 = vmatpush1.msra.mxu0 0.0
    %224 = vmatprep.subr.mxu0 0.0
    %225 = vmatpush1.msra.mxu0 0.0
    %226 = vmatprep.subr.mxu0 0.0
    %227 = vmatpush1.msra.mxu0 0.0
    %228 = vmatprep.subr.mxu0 0.0
    %229 = vmatpush1.msra.mxu0 0.0
    %230 = vmatprep.subr.mxu0 0.0
    %231 = vmatpush1.msra.mxu0 0.0
    %232 = vmatprep.subr.mxu0 0.0
    %233 = vmatpush1.msra.mxu0 0.0
    %234 = vmatprep.subr.mxu0 0.0
    %235 = vmatpush1.msra.mxu0 0.0
    %236 = vmatprep.subr.mxu0 0.0
    %237 = vmatpush1.msra.mxu0 0.0
    %238 = vmatprep.subr.mxu0 0.0
    %239 = vmatpush1.msra.mxu0 0.0
    %240 = vmatprep.subr.mxu0 0.0
    %241 = vmatpush1.msra.mxu0 0.0
    %242 = vmatprep.subr.mxu0 0.0
    %243 = vmatpush1.msra.mxu0 0.0
    %244 = vmatprep.mubr.f32.mxu0 0.0
    %245 = vmatmul.mubr.f32.gmra.mrb[0].mxu0 %v178
    %v246 = vpop.f32.mrb[0].mxu0
    %v247 = vadd.f32 %v175, %v246
    %v248 = vpop.f32.mrb[0].mxu0
    %v249 = vadd.f32 %v175, %v248
    %250 = vdwg.mxu0
    %v251 = vsub.f32 0.0, %v247
    %v252 = vsub.f32 0.0, %v249
    %v253 = vmul.f32 %v251, 1.442695
    %v254 = vpow.pop %v253
    %v255 = vmul.f32 %v252, 1.442695
    %v256 = vpow.pop %v255
    %v257 = vadd.f32 %v254, 1.0
    %v258 = vadd.f32 %v256, 1.0
    %v259 = vrcp.pop %v257
    %v260 = vrcp.pop %v258
    %v263 = vcombine.low %v259, %v260
    %v265 = vunpack.c.l.s4 1966171168
    %v266 = vunpack.c.0.s8 %v265
    %v267 = vlaneseq
    %v268 = vshrl.u32 %v267, 7
    %v269 = vsub.s32 %v266, %v268
    %v270 = vrot.slane %v263, %v269
    %v272 = vunpack.c.l.s4 1966171168
    %v273 = vunpack.c.0.s8 %v272
    %v274 = vlaneseq
    %v275 = vshrl.u32 %v274, 7
    %v276 = vsub.s32 %v273, %v275
    %v277 = vrot.slane %v270, %v276
    %v279 = vlaneseq
    %vm280 = vcmp.ge.s32.totalorder %v279, 0
    %vm281 = vcmp.lt.s32.totalorder %v279, 256
    %vm282 = vmand %vm280, %vm281
    %283 = vst.msk [vmem:[%s5] sm:$0x3] %vm282, %v277
    // Predicated region
    $region26: #{ppo_forward.1} parent=1 // pred_check
      _
    $region27: #{ppo_forward.1} parent=1 // pred_check_branch
      %285 = sbr.rel (0) target = $region29
    $region28: #{ppo_forward.1} parent=1 // pred_region
      _
    $region29: #{ppo_forward.1} parent=1 // pred_fallthru
      _
    // Predicated region
    $region30: #{ppo_forward.1} parent=1 // pred_check
      _
    $region31: #{ppo_forward.1} parent=1 // pred_check_branch
      %287 = sbr.rel (0) target = $region33
    $region32: #{ppo_forward.1} parent=1 // pred_region
      _
    $region33: #{ppo_forward.1} parent=1 // pred_fallthru
      _
    %288 = vsyncpa [#allocation4], 1

</llo_original>
